<compile_context>
chip_gen: v6e
topology: v6e:2x2x1
jax: 0.10.0
libtpu: 0.0.40
codegen_flags: <defaults>
</compile_context>

<pallas_src>
import jax
import jax.numpy as jnp
import numpy as np
from jax.experimental import pallas as pl
from jax.experimental.pallas import tpu as pltpu

HIDDEN = 32  # fixed hidden width of the PyTorch module


def _round_up(n, m):
    return ((n + m - 1) // m) * m


# -----------------------------------------------------------------------------
# One-time parameter packing: 4 weights + 4 biases -> one (8,128)-aligned slab.
# Weights keep the PyTorch (out_features, in_features) layout (feature-major
# kernel needs no transpose); biases are stored as columns (len, 1) so they
# broadcast along the lane (batch) axis inside the kernel.
# -----------------------------------------------------------------------------
def pack_params(params):
    pieces = [
        ("w1", params["w1"]),                   # (H, Din)
        ("b1", params["b1"].reshape(-1, 1)),    # (H, 1)
        ("w2", params["w2"]),                   # (E, H)
        ("b2", params["b2"].reshape(-1, 1)),    # (E, 1)
        ("w3", params["w3"]),                   # (H, E)
        ("b3", params["b3"].reshape(-1, 1)),    # (H, 1)
        ("w4", params["w4"]),                   # (Din, H)
        ("b4", params["b4"].reshape(-1, 1)),    # (Din, 1)
    ]
    offs = {}
    row, max_col = 0, 0
    for name, a in pieces:
        r, c = a.shape
        offs[name] = (row, r, c)
        row += _round_up(r, 8)          # keep every piece on a sublane-tile boundary
        max_col = max(max_col, c)
    R = _round_up(max(row, 8), 8)
    C = _round_up(max(max_col, 128), 128)
    slab = np.zeros((R, C), np.float32)
    for name, a in pieces:
        ro, r, c = offs[name]
        slab[ro:ro + r, :c] = np.asarray(a, np.float32)
    return jnp.asarray(slab), offs


# -----------------------------------------------------------------------------
# Fully fused feature-major forward: 4 matmuls + 3 ReLUs in one body.
#   x_ref : (Din, bt)   batch on the 128-lane axis
#   p_ref : packed parameter slab (constant block every grid step)
#   o_ref : (Din, bt)
# -----------------------------------------------------------------------------
def _make_kernel(offs):
    def piece(p_ref, name):
        ro, r, c = offs[name]           # static Python ints -> view slice, free
        return p_ref[ro:ro + r, 0:c]

    def kernel(xT_ref, p_ref, oT_ref):
        x = xT_ref[...]                                                  # (Din, bt)
        h = jnp.maximum(
            jnp.dot(piece(p_ref, "w1"), x, preferred_element_type=jnp.float32)
            + piece(p_ref, "b1"), 0.0)                                   # (H, bt)
        e = jnp.maximum(
            jnp.dot(piece(p_ref, "w2"), h, preferred_element_type=jnp.float32)
            + piece(p_ref, "b2"), 0.0)                                   # (E, bt)
        d = jnp.maximum(
            jnp.dot(piece(p_ref, "w3"), e, preferred_element_type=jnp.float32)
            + piece(p_ref, "b3"), 0.0)                                   # (H, bt)
        oT_ref[...] = (
            jnp.dot(piece(p_ref, "w4"), d, preferred_element_type=jnp.float32)
            + piece(p_ref, "b4"))                                        # (Din, bt)

    return kernel


# -----------------------------------------------------------------------------
# Wrapper: transpose/pad once, one pallas_call over lane-dense batch tiles.
# -----------------------------------------------------------------------------
def autoencoder_forward(x, slab, offs, *, batch_tile=4096):
    """x: (B, Din) f32 -> (B, Din) f32, one fused pallas_call."""
    B, Din = x.shape

    # Batch lives on the lane axis -> tile must be a multiple of 128.
    bt = min(_round_up(batch_tile, 128), _round_up(B, 128))
    Bpad = _round_up(_round_up(B, 128), bt)
    grid = (Bpad // bt,)

    # Layout work done once in the wrapper, not per layer: feature-major X^T,
    # batch padded to the tile width (padded rows are independent, sliced off).
    xT = jnp.pad(x.T, ((0, 0), (0, Bpad - B)))

    oT = pl.pallas_call(
        _make_kernel(offs),
        out_shape=jax.ShapeDtypeStruct((Din, Bpad), jnp.float32),
        grid=grid,
        in_specs=[
            # activations: one lane-dense batch tile per grid step
            pl.BlockSpec((Din, bt), lambda i: (0, i)),
            # all parameters: single slab, constant block index (no re-fetch)
            pl.BlockSpec(slab.shape, lambda i: (0, 0)),
        ],
        out_specs=pl.BlockSpec((Din, bt), lambda i: (0, i)),
        compiler_params=pltpu.CompilerParams(
            dimension_semantics=("parallel",)),  # batch tiles are independent
    )(xT, slab)

    return oT[:, :B].T


# -----------------------------------------------------------------------------
# Pure-JAX reference mirroring the PyTorch module (for correctness check)
# -----------------------------------------------------------------------------
def reference_forward(x, p):
    h = jax.nn.relu(x @ p["w1"].T + p["b1"])
    e = jax.nn.relu(h @ p["w2"].T + p["b2"])
    d = jax.nn.relu(e @ p["w3"].T + p["b3"])
    return d @ p["w4"].T + p["b4"]


# -----------------------------------------------------------------------------
# Deterministic parameter construction (PyTorch nn.Linear-style init, kept in
# the native (out_features, in_features) layout).
# -----------------------------------------------------------------------------
def init_params(input_dim, encoding_dim, key):
    ks = jax.random.split(key, 8)

    def u(k, shape, fan_in):
        bound = 1.0 / np.sqrt(fan_in)
        return jax.random.uniform(k, shape, jnp.float32, -bound, bound)

    return {
        "w1": u(ks[0], (HIDDEN, input_dim), input_dim),
        "b1": u(ks[1], (HIDDEN,), input_dim),
        "w2": u(ks[2], (encoding_dim, HIDDEN), HIDDEN),
        "b2": u(ks[3], (encoding_dim,), HIDDEN),
        "w3": u(ks[4], (HIDDEN, encoding_dim), encoding_dim),
        "b3": u(ks[5], (HIDDEN,), encoding_dim),
        "w4": u(ks[6], (input_dim, HIDDEN), HIDDEN),
        "b4": u(ks[7], (input_dim,), HIDDEN),
    }


if __name__ == "__main__":
    B, INPUT_DIM, ENCODING_DIM = 8, 16, 8

    key = jax.random.PRNGKey(0)
    k_x, k_p = jax.random.split(key)
    x = jax.random.normal(k_x, (B, INPUT_DIM), dtype=jnp.float32)

    params = init_params(INPUT_DIM, ENCODING_DIM, k_p)
    slab, offs = pack_params(params)

    out = jax.block_until_ready(autoencoder_forward(x, slab, offs))
    ref = jax.block_until_ready(reference_forward(x, params))

    assert out.shape == (B, INPUT_DIM)
    np.testing.assert_allclose(np.asarray(out), np.asarray(ref),
                               rtol=1e-5, atol=1e-5)
    print("KERNEL_OK")
</pallas_src>

<mosaic_0001>
module attributes {stable_mosaic.version = 11 : i64} {
  func.func @kernel(%arg0: i32, %arg1: memref<16x128xf32, #tpu.memory_space<vmem>>, %arg2: memref<176x128xf32, #tpu.memory_space<vmem>>, %arg3: memref<16x128xf32, #tpu.memory_space<vmem>>) attributes {dimension_semantics = [#tpu.dimension_semantics<parallel>], iteration_bounds = array<i64: 1>, scalar_prefetch = 0 : i64, scratch_operands = 0 : i64, tpu.core_type = #tpu.core_type<tc>, window_params = [{transform_indices = @transform_0, window_bounds = array<i64: 16, 128>}, {pipeline_mode = #tpu.pipeline_mode<synchronous>, transform_indices = @transform_1, window_bounds = array<i64: 176, 128>}, {transform_indices = @transform_2, window_bounds = array<i64: 16, 128>}]} {
    %c0 = arith.constant 0 : index
    %c0_0 = arith.constant 0 : index
    %0 = vector.load %arg1[%c0, %c0_0] : memref<16x128xf32, #tpu.memory_space<vmem>>, vector<16x128xf32>
    %c0_1 = arith.constant 0 : index
    %c0_2 = arith.constant 0 : index
    %1 = vector.load %arg2[%c0_1, %c0_2] : memref<176x128xf32, #tpu.memory_space<vmem>>, vector<32x16xf32>
    %cst = arith.constant dense<0.000000e+00> : vector<32x128xf32>
    %2 = tpu.matmul %1, %0, %cst {dimension_numbers = #tpu.dot_dimension_numbers<[1], [0], [0], [1], [0, 0, 1, 1], [], []>} : vector<32x16xf32>, vector<16x128xf32>, vector<32x128xf32> -> vector<32x128xf32>
    %c32 = arith.constant 32 : index
    %c0_3 = arith.constant 0 : index
    %3 = vector.load %arg2[%c32, %c0_3] : memref<176x128xf32, #tpu.memory_space<vmem>>, vector<32x1xf32>
    %4 = vector.broadcast %3 : vector<32x1xf32> to vector<32x128xf32>
    %5 = arith.addf %2, %4 : vector<32x128xf32>
    %cst_4 = arith.constant 0.000000e+00 : f32
    %6 = vector.broadcast %cst_4 : f32 to vector<32x128xf32>
    %7 = arith.maximumf %5, %6 : vector<32x128xf32>
    %c64 = arith.constant 64 : index
    %c0_5 = arith.constant 0 : index
    %8 = vector.load %arg2[%c64, %c0_5] : memref<176x128xf32, #tpu.memory_space<vmem>>, vector<8x32xf32>
    %cst_6 = arith.constant dense<0.000000e+00> : vector<8x128xf32>
    %9 = tpu.matmul %8, %7, %cst_6 {dimension_numbers = #tpu.dot_dimension_numbers<[1], [0], [0], [1], [0, 0, 1, 1], [], []>} : vector<8x32xf32>, vector<32x128xf32>, vector<8x128xf32> -> vector<8x128xf32>
    %c72 = arith.constant 72 : index
    %c0_7 = arith.constant 0 : index
    %10 = vector.load %arg2[%c72, %c0_7] : memref<176x128xf32, #tpu.memory_space<vmem>>, vector<8x1xf32>
    %11 = vector.broadcast %10 : vector<8x1xf32> to vector<8x128xf32>
    %12 = arith.addf %9, %11 : vector<8x128xf32>
    %cst_8 = arith.constant 0.000000e+00 : f32
    %13 = vector.broadcast %cst_8 : f32 to vector<8x128xf32>
    %14 = arith.maximumf %12, %13 : vector<8x128xf32>
    %c80 = arith.constant 80 : index
    %c0_9 = arith.constant 0 : index
    %15 = vector.load %arg2[%c80, %c0_9] : memref<176x128xf32, #tpu.memory_space<vmem>>, vector<32x8xf32>
    %cst_10 = arith.constant dense<0.000000e+00> : vector<32x128xf32>
    %16 = tpu.matmul %15, %14, %cst_10 {dimension_numbers = #tpu.dot_dimension_numbers<[1], [0], [0], [1], [0, 0, 1, 1], [], []>} : vector<32x8xf32>, vector<8x128xf32>, vector<32x128xf32> -> vector<32x128xf32>
    %c112 = arith.constant 112 : index
    %c0_11 = arith.constant 0 : index
    %17 = vector.load %arg2[%c112, %c0_11] : memref<176x128xf32, #tpu.memory_space<vmem>>, vector<32x1xf32>
    %18 = vector.broadcast %17 : vector<32x1xf32> to vector<32x128xf32>
    %19 = arith.addf %16, %18 : vector<32x128xf32>
    %cst_12 = arith.constant 0.000000e+00 : f32
    %20 = vector.broadcast %cst_12 : f32 to vector<32x128xf32>
    %21 = arith.maximumf %19, %20 : vector<32x128xf32>
    %c144 = arith.constant 144 : index
    %c0_13 = arith.constant 0 : index
    %22 = vector.load %arg2[%c144, %c0_13] : memref<176x128xf32, #tpu.memory_space<vmem>>, vector<16x32xf32>
    %cst_14 = arith.constant dense<0.000000e+00> : vector<16x128xf32>
    %23 = tpu.matmul %22, %21, %cst_14 {dimension_numbers = #tpu.dot_dimension_numbers<[1], [0], [0], [1], [0, 0, 1, 1], [], []>} : vector<16x32xf32>, vector<32x128xf32>, vector<16x128xf32> -> vector<16x128xf32>
    %c160 = arith.constant 160 : index
    %c0_15 = arith.constant 0 : index
    %24 = vector.load %arg2[%c160, %c0_15] : memref<176x128xf32, #tpu.memory_space<vmem>>, vector<16x1xf32>
    %25 = vector.broadcast %24 : vector<16x1xf32> to vector<16x128xf32>
    %26 = arith.addf %23, %25 : vector<16x128xf32>
    %c0_16 = arith.constant 0 : index
    %c0_17 = arith.constant 0 : index
    %27 = vector.load %arg3[%c0_16, %c0_17] : memref<16x128xf32, #tpu.memory_space<vmem>>, vector<16x128xf32>
    tpu.vector_store %arg3[%c0_16, %c0_17], %26 {strides = array<i32>} : memref<16x128xf32, #tpu.memory_space<vmem>>, vector<16x128xf32>,
    return
  }
  func.func @transform_0(%arg0: i32) -> (i32, i32) {
    %c0_i32 = arith.constant 0 : i32
    %c0_i32_0 = arith.constant 0 : i32
    return %c0_i32, %arg0 : i32, i32
  }
  func.func @transform_1(%arg0: i32) -> (i32, i32) {
    %c0_i32 = arith.constant 0 : i32
    %c0_i32_0 = arith.constant 0 : i32
    %c0_i32_1 = arith.constant 0 : i32
    return %c0_i32, %c0_i32_0 : i32, i32
  }
  func.func @transform_2(%arg0: i32) -> (i32, i32) {
    %c0_i32 = arith.constant 0 : i32
    %c0_i32_0 = arith.constant 0 : i32
    return %c0_i32, %arg0 : i32, i32
  }
}

</mosaic_0001>

<llo_original>
// kernel: tpu_custom_call.1
$region0: #{tpu_custom_call.1}
  #allocation0 [shape = 'u32[]', space=smem, size = 0x4, offset = 0x4, fixed_abs, tag = 'smem constant byte address 0x4 - core index']
  #allocation1 [shape = 'u32[144,128]{1,0:T(1,128)}', space=vmem, size = 0x12000, scoped, tag = 'internal scratch']
  %s0 = inlined_call_operand.hbm [shape: f32[16,128], index: 0, kind: input, shape index: {}]
  %s1 = inlined_call_operand.hbm [shape: f32[176,128], index: 1, kind: input, shape index: {}]
  %s2 = inlined_call_operand.hbm [shape: f32[16,128], index: 2, kind: output, shape index: {}]
  %s3 = sld [smem:[#allocation0]]
  $region26: #{tpu_custom_call.1} parent=0
    _
  %s5 = ssub.s32 1, %s3
  %s6 = scalar_select 0, %s5, %s3
  $region1: #{tpu_custom_call.1} parent=0
    #allocation2 [shape = 'u8[8192]{0}', space=vmem, size = 0x2000, scoped, tag = 'input window, operand 0, single buffered']
    #allocation3 [shape = 's32[1]{0}', space=sflag, size = 0x4, scoped, tag = 'scoped memory for tpu_custom_call.1']
    #allocation4 [shape = 's32[1]{0}', space=sflag, size = 0x4, scoped, tag = 'scoped memory for tpu_custom_call.1']
    #allocation5 [shape = 'u8[90112]{0}', space=vmem, size = 0x16000, scoped, tag = 'input window, operand 1, single buffered']
    #allocation6 [shape = 's32[1]{0}', space=sflag, size = 0x4, scoped, tag = 'scoped memory for tpu_custom_call.1']
    #allocation7 [shape = 'u8[8192]{0}', space=vmem, size = 0x2000, scoped, tag = 'output window, operand 0, single buffered']
    %7 = vsyncpa [#allocation3], 0
    %8 = vsyncpa [#allocation6], 0
    %9 = vsyncpa [#allocation4], 0
    // Predicated region
    $region2: #{tpu_custom_call.1} parent=1 // pred_check
      _
    $region3: #{tpu_custom_call.1} parent=1 // pred_check_branch
      %11 = sbr.rel (0) target = $region5
    $region4: #{tpu_custom_call.1} parent=1 // pred_region
      %s13 = ssub.s32 256, 256
      %14 = vsyncadd [#allocation3], %s13
      %s15 = sshll.u32 [#allocation2], 4
      %s16 = int_to_ptr.vmem [resolvable:$true] %s15
      %21 = dma.hbm_to_vmem [thread:$0]  %s0, 256, %s16, [#allocation3], 128, 128, 8
    $region5: #{tpu_custom_call.1} parent=1 // pred_fallthru
      _
    // Predicated region
    $region6: #{tpu_custom_call.1} parent=1 // pred_check
      _
    $region7: #{tpu_custom_call.1} parent=1 // pred_check_branch
      %23 = sbr.rel (0) target = $region9
    $region8: #{tpu_custom_call.1} parent=1 // pred_region
      %s25 = ssub.s32 2816, 2816
      %26 = vsyncadd [#allocation6], %s25
      %s27 = sshll.u32 [#allocation5], 4
      %s28 = int_to_ptr.vmem [resolvable:$true] %s27
      %33 = dma.hbm_to_vmem [thread:$0]  %s1, 2816, %s28, [#allocation6], 128, 128, 8
    $region9: #{tpu_custom_call.1} parent=1 // pred_fallthru
      _
    // Predicated region
    $region10: #{tpu_custom_call.1} parent=1 // pred_check
      _
    $region11: #{tpu_custom_call.1} parent=1 // pred_check_branch
      %35 = sbr.rel (0) target = $region13
    $region12: #{tpu_custom_call.1} parent=1 // pred_region
      %36 = dma.done [#allocation3], 256
    $region13: #{tpu_custom_call.1} parent=1 // pred_fallthru
      _
    // Predicated region
    $region14: #{tpu_custom_call.1} parent=1 // pred_check
      _
    $region15: #{tpu_custom_call.1} parent=1 // pred_check_branch
      %38 = sbr.rel (0) target = $region17
    $region16: #{tpu_custom_call.1} parent=1 // pred_region
      %39 = dma.done [#allocation6], 2816
    $region17: #{tpu_custom_call.1} parent=1 // pred_fallthru
      _
    %v40 = vld [vmem:[#allocation2] sm:$0xff]
    %v41 = vld [vmem:[#allocation2 + $0x8] sm:$0xff]
    %v42 = vld [vmem:[#allocation5] sm:$0xff]
    %v43 = vld [vmem:[#allocation5 + $0x8] sm:$0xff]
    %v44 = vld [vmem:[#allocation5 + $0x10] sm:$0xff]
    %v45 = vld [vmem:[#allocation5 + $0x18] sm:$0xff]
    %v46 = vld [vmem:[#allocation5 + $0x20] sm:$0xff]
    %v47 = vld [vmem:[#allocation5 + $0x28] sm:$0xff]
    %v48 = vld [vmem:[#allocation5 + $0x30] sm:$0xff]
    %v49 = vld [vmem:[#allocation5 + $0x38] sm:$0xff]
    %51 = vset.pattern.permute.xlu0 0
    %52 = vperm.xlu0 %51, %v46
    %v53 = vpop.permute.xlu0 %52
    %56 = vset.pattern.permute.xlu0 0
    %57 = vperm.xlu0 %56, %v47
    %v58 = vpop.permute.xlu0 %57
    %61 = vset.pattern.permute.xlu0 0
    %62 = vperm.xlu0 %61, %v48
    %v63 = vpop.permute.xlu0 %62
    %66 = vset.pattern.permute.xlu0 0
    %67 = vperm.xlu0 %66, %v49
    %v68 = vpop.permute.xlu0 %67
    %vm70 = vcmask 130048
    %v72 = vsel %vm70, %v42, 0
    %v75 = vsel %vm70, %v43, 0
    %v78 = vsel %vm70, %v44, 0
    %v81 = vsel %vm70, %v45, 0
    %83 = vmatprep.subr.mxu0 0.0
    %84 = vmatpush1.msra.mxu0 0.0
    %85 = vmatprep.subr.mxu0 0.0
    %86 = vmatpush1.msra.mxu0 0.0
    %87 = vmatprep.subr.mxu0 0.0
    %88 = vmatpush1.msra.mxu0 0.0
    %89 = vmatprep.subr.mxu0 0.0
    %90 = vmatpush1.msra.mxu0 0.0
    %91 = vmatprep.subr.mxu0 0.0
    %92 = vmatpush1.msra.mxu0 0.0
    %93 = vmatprep.subr.mxu0 0.0
    %94 = vmatpush1.msra.mxu0 0.0
    %95 = vmatprep.subr.mxu0 0.0
    %96 = vmatpush1.msra.mxu0 0.0
    %97 = vmatprep.subr.mxu0 0.0
    %98 = vmatpush1.msra.mxu0 0.0
    %99 = vmatprep.subr.mxu0 0.0
    %100 = vmatpush1.msra.mxu0 0.0
    %101 = vmatprep.subr.mxu0 0.0
    %102 = vmatpush1.msra.mxu0 0.0
    %103 = vmatprep.subr.mxu0 0.0
    %104 = vmatpush1.msra.mxu0 0.0
    %105 = vmatprep.subr.mxu0 0.0
    %106 = vmatpush1.msra.mxu0 0.0
    %107 = vmatprep.subr.mxu0 0.0
    %108 = vmatpush1.msra.mxu0 0.0
    %109 = vmatprep.subr.mxu0 0.0
    %110 = vmatpush1.msra.mxu0 0.0
    %111 = vmatprep.subr.mxu0 0.0
    %112 = vmatpush1.msra.mxu0 %v41
    %113 = vmatprep.subr.mxu0 0.0
    %114 = vmatpush1.msra.mxu0 %v40
    %115 = vmatprep.subr.mxu0 0.0
    %116 = vmatpush2.msra.mxu0 0.0
    %117 = vmatprep.subr.mxu0 0.0
    %118 = vmatpush2.msra.mxu0 0.0
    %119 = vmatprep.subr.mxu0 0.0
    %120 = vmatpush2.msra.mxu0 0.0
    %121 = vmatprep.subr.mxu0 0.0
    %122 = vmatpush2.msra.mxu0 0.0
    %123 = vmatprep.subr.mxu0 0.0
    %124 = vmatpush2.msra.mxu0 0.0
    %125 = vmatprep.subr.mxu0 0.0
    %126 = vmatpush2.msra.mxu0 0.0
    %127 = vmatprep.subr.mxu0 0.0
    %128 = vmatpush2.msra.mxu0 0.0
    %129 = vmatprep.subr.mxu0 0.0
    %130 = vmatpush2.msra.mxu0 0.0
    %131 = vmatprep.subr.mxu0 0.0
    %132 = vmatpush2.msra.mxu0 0.0
    %133 = vmatprep.subr.mxu0 0.0
    %134 = vmatpush2.msra.mxu0 0.0
    %135 = vmatprep.subr.mxu0 0.0
    %136 = vmatpush2.msra.mxu0 0.0
    %137 = vmatprep.subr.mxu0 0.0
    %138 = vmatpush2.msra.mxu0 0.0
    %139 = vmatprep.subr.mxu0 0.0
    %140 = vmatpush2.msra.mxu0 0.0
    %141 = vmatprep.subr.mxu0 0.0
    %142 = vmatpush2.msra.mxu0 0.0
    %143 = vmatprep.subr.mxu0 0.0
    %144 = vmatpush2.msra.mxu0 0.0
    %145 = vmatprep.subr.mxu0 0.0
    %146 = vmatpush2.msra.mxu0 0.0
    %147 = vmatprep.mubr.f32.mxu0 0.0
    %148 = vmatmul.mubr.f32.gmra.mxu0 %v72
    %v149 = vpop.f32.mrf.mxu0
    %v150 = vadd.f32 %v53, %v149
    %v151 = vpop.f32.mrf.mxu0
    %152 = vmatprep.mubr.f32.mxu0 0.0
    %153 = vmatmul.mubr.f32.gmra.mxu0 %v75
    %v154 = vpop.f32.mrf.mxu0
    %v155 = vadd.f32 %v58, %v154
    %v156 = vpop.f32.mrf.mxu0
    %157 = vmatprep.mubr.f32.mxu0 0.0
    %158 = vmatmul.mubr.f32.gmra.mxu0 %v78
    %v159 = vpop.f32.mrf.mxu0
    %v160 = vadd.f32 %v63, %v159
    %v161 = vpop.f32.mrf.mxu0
    %162 = vmatprep.mubr.f32.mxu0 0.0
    %163 = vmatmul.mubr.f32.gmra.mxu0 %v81
    %v164 = vpop.f32.mrf.mxu0
    %v165 = vadd.f32 %v68, %v164
    %v166 = vpop.f32.mrf.mxu0
    %167 = vdwg.mxu0
    %v168 = vmax.f32 %v150, 0.0
    %v169 = vmax.f32 %v155, 0.0
    %v170 = vmax.f32 %v160, 0.0
    %v171 = vmax.f32 %v165, 0.0
    %v172 = vld [vmem:[#allocation5 + $0x40] sm:$0xff]
    %v173 = vld [vmem:[#allocation5 + $0x48] sm:$0xff]
    %175 = vset.pattern.permute.xlu0 0
    %176 = vperm.xlu0 %175, %v173
    %v177 = vpop.permute.xlu0 %176
    %vm179 = vcmask 261120
    %v181 = vsel %vm179, %v172, 0
    %183 = vmatprep.subr.mxu0 0.0
    %184 = vmatpush1.msra.mxu0 0.0
    %185 = vmatprep.subr.mxu0 0.0
    %186 = vmatpush1.msra.mxu0 0.0
    %187 = vmatprep.subr.mxu0 0.0
    %188 = vmatpush1.msra.mxu0 0.0
    %189 = vmatprep.subr.mxu0 0.0
    %190 = vmatpush1.msra.mxu0 0.0
    %191 = vmatprep.subr.mxu0 0.0
    %192 = vmatpush1.msra.mxu0 0.0
    %193 = vmatprep.subr.mxu0 0.0
    %194 = vmatpush1.msra.mxu0 0.0
    %195 = vmatprep.subr.mxu0 0.0
    %196 = vmatpush1.msra.mxu0 0.0
    %197 = vmatprep.subr.mxu0 0.0
    %198 = vmatpush1.msra.mxu0 0.0
    %199 = vmatprep.subr.mxu0 0.0
    %200 = vmatpush1.msra.mxu0 0.0
    %201 = vmatprep.subr.mxu0 0.0
    %202 = vmatpush1.msra.mxu0 0.0
    %203 = vmatprep.subr.mxu0 0.0
    %204 = vmatpush1.msra.mxu0 0.0
    %205 = vmatprep.subr.mxu0 0.0
    %206 = vmatpush1.msra.mxu0 0.0
    %207 = vmatprep.subr.mxu0 0.0
    %208 = vmatpush1.msra.mxu0 %v171
    %209 = vmatprep.subr.mxu0 0.0
    %210 = vmatpush1.msra.mxu0 %v170
    %211 = vmatprep.subr.mxu0 0.0
    %212 = vmatpush1.msra.mxu0 %v169
    %213 = vmatprep.subr.mxu0 0.0
    %214 = vmatpush1.msra.mxu0 %v168
    %215 = vmatprep.subr.mxu0 0.0
    %216 = vmatpush2.msra.mxu0 0.0
    %217 = vmatprep.subr.mxu0 0.0
    %218 = vmatpush2.msra.mxu0 0.0
    %219 = vmatprep.subr.mxu0 0.0
    %220 = vmatpush2.msra.mxu0 0.0
    %221 = vmatprep.subr.mxu0 0.0
    %222 = vmatpush2.msra.mxu0 0.0
    %223 = vmatprep.subr.mxu0 0.0
    %224 = vmatpush2.msra.mxu0 0.0
    %225 = vmatprep.subr.mxu0 0.0
    %226 = vmatpush2.msra.mxu0 0.0
    %227 = vmatprep.subr.mxu0 0.0
    %228 = vmatpush2.msra.mxu0 0.0
    %229 = vmatprep.subr.mxu0 0.0
    %230 = vmatpush2.msra.mxu0 0.0
    %231 = vmatprep.subr.mxu0 0.0
    %232 = vmatpush2.msra.mxu0 0.0
    %233 = vmatprep.subr.mxu0 0.0
    %234 = vmatpush2.msra.mxu0 0.0
    %235 = vmatprep.subr.mxu0 0.0
    %236 = vmatpush2.msra.mxu0 0.0
    %237 = vmatprep.subr.mxu0 0.0
    %238 = vmatpush2.msra.mxu0 0.0
    %239 = vmatprep.subr.mxu0 0.0
    %240 = vmatpush2.msra.mxu0 0.0
    %241 = vmatprep.subr.mxu0 0.0
    %242 = vmatpush2.msra.mxu0 0.0
    %243 = vmatprep.subr.mxu0 0.0
    %244 = vmatpush2.msra.mxu0 0.0
    %245 = vmatprep.subr.mxu0 0.0
    %246 = vmatpush2.msra.mxu0 0.0
    %247 = vmatprep.mubr.f32.mxu0 0.0
    %248 = vmatmul.mubr.f32.gmra.mxu0 %v181
    %v249 = vpop.f32.mrf.mxu0
    %v250 = vadd.f32 %v177, %v249
    %v251 = vpop.f32.mrf.mxu0
    %252 = vdwg.mxu0
    %v253 = vmax.f32 %v250, 0.0
    %v254 = vld [vmem:[#allocation5 + $0x50] sm:$0xff]
    %v255 = vld [vmem:[#allocation5 + $0x58] sm:$0xff]
    %v256 = vld [vmem:[#allocation5 + $0x60] sm:$0xff]
    %v257 = vld [vmem:[#allocation5 + $0x68] sm:$0xff]
    %v258 = vld [vmem:[#allocation5 + $0x70] sm:$0xff]
    %v259 = vld [vmem:[#allocation5 + $0x78] sm:$0xff]
    %v260 = vld [vmem:[#allocation5 + $0x80] sm:$0xff]
    %v261 = vld [vmem:[#allocation5 + $0x88] sm:$0xff]
    %263 = vset.pattern.permute.xlu0 0
    %264 = vperm.xlu0 %263, %v258
    %v265 = vpop.permute.xlu0 %264
    %268 = vset.pattern.permute.xlu0 0
    %269 = vperm.xlu0 %268, %v259
    %v270 = vpop.permute.xlu0 %269
    %273 = vset.pattern.permute.xlu0 0
    %274 = vperm.xlu0 %273, %v260
    %v275 = vpop.permute.xlu0 %274
    %278 = vset.pattern.permute.xlu0 0
    %279 = vperm.xlu0 %278, %v261
    %v280 = vpop.permute.xlu0 %279
    %vm282 = vcmask 64512
    %v284 = vsel %vm282, %v254, 0
    %v287 = vsel %vm282, %v255, 0
    %v290 = vsel %vm282, %v256, 0
    %v293 = vsel %vm282, %v257, 0
    %295 = vmatprep.subr.mxu0 0.0
    %296 = vmatpush1.msra.mxu0 0.0
    %297 = vmatprep.subr.mxu0 0.0
    %298 = vmatpush1.msra.mxu0 0.0
    %299 = vmatprep.subr.mxu0 0.0
    %300 = vmatpush1.msra.mxu0 0.0
    %301 = vmatprep.subr.mxu0 0.0
    %302 = vmatpush1.msra.mxu0 0.0
    %303 = vmatprep.subr.mxu0 0.0
    %304 = vmatpush1.msra.mxu0 0.0
    %305 = vmatprep.subr.mxu0 0.0
    %306 = vmatpush1.msra.mxu0 0.0
    %307 = vmatprep.subr.mxu0 0.0
    %308 = vmatpush1.msra.mxu0 0.0
    %309 = vmatprep.subr.mxu0 0.0
    %310 = vmatpush1.msra.mxu0 0.0
    %311 = vmatprep.subr.mxu0 0.0
    %312 = vmatpush1.msra.mxu0 0.0
    %313 = vmatprep.subr.mxu0 0.0
    %314 = vmatpush1.msra.mxu0 0.0
    %315 = vmatprep.subr.mxu0 0.0
    %316 = vmatpush1.msra.mxu0 0.0
    %317 = vmatprep.subr.mxu0 0.0
    %318 = vmatpush1.msra.mxu0 0.0
    %319 = vmatprep.subr.mxu0 0.0
    %320 = vmatpush1.msra.mxu0 0.0
    %321 = vmatprep.subr.mxu0 0.0
    %322 = vmatpush1.msra.mxu0 0.0
    %323 = vmatprep.subr.mxu0 0.0
    %324 = vmatpush1.msra.mxu0 0.0
    %325 = vmatprep.subr.mxu0 0.0
    %326 = vmatpush1.msra.mxu0 %v253
    %327 = vmatprep.subr.mxu0 0.0
    %328 = vmatpush2.msra.mxu0 0.0
    %329 = vmatprep.subr.mxu0 0.0
    %330 = vmatpush2.msra.mxu0 0.0
    %331 = vmatprep.subr.mxu0 0.0
    %332 = vmatpush2.msra.mxu0 0.0
    %333 = vmatprep.subr.mxu0 0.0
    %334 = vmatpush2.msra.mxu0 0.0
    %335 = vmatprep.subr.mxu0 0.0
    %336 = vmatpush2.msra.mxu0 0.0
    %337 = vmatprep.subr.mxu0 0.0
    %338 = vmatpush2.msra.mxu0 0.0
    %339 = vmatprep.subr.mxu0 0.0
    %340 = vmatpush2.msra.mxu0 0.0
    %341 = vmatprep.subr.mxu0 0.0
    %342 = vmatpush2.msra.mxu0 0.0
    %343 = vmatprep.subr.mxu0 0.0
    %344 = vmatpush2.msra.mxu0 0.0
    %345 = vmatprep.subr.mxu0 0.0
    %346 = vmatpush2.msra.mxu0 0.0
    %347 = vmatprep.subr.mxu0 0.0
    %348 = vmatpush2.msra.mxu0 0.0
    %349 = vmatprep.subr.mxu0 0.0
    %350 = vmatpush2.msra.mxu0 0.0
    %351 = vmatprep.subr.mxu0 0.0
    %352 = vmatpush2.msra.mxu0 0.0
    %353 = vmatprep.subr.mxu0 0.0
    %354 = vmatpush2.msra.mxu0 0.0
    %355 = vmatprep.subr.mxu0 0.0
    %356 = vmatpush2.msra.mxu0 0.0
    %357 = vmatprep.subr.mxu0 0.0
    %358 = vmatpush2.msra.mxu0 0.0
    %359 = vmatprep.mubr.f32.mxu0 0.0
    %360 = vmatmul.mubr.f32.gmra.mxu0 %v284
    %v361 = vpop.f32.mrf.mxu0
    %v362 = vadd.f32 %v265, %v361
    %v363 = vpop.f32.mrf.mxu0
    %364 = vmatprep.mubr.f32.mxu0 0.0
    %365 = vmatmul.mubr.f32.gmra.mxu0 %v287
    %v366 = vpop.f32.mrf.mxu0
    %v367 = vadd.f32 %v270, %v366
    %v368 = vpop.f32.mrf.mxu0
    %369 = vmatprep.mubr.f32.mxu0 0.0
    %370 = vmatmul.mubr.f32.gmra.mxu0 %v290
    %v371 = vpop.f32.mrf.mxu0
    %v372 = vadd.f32 %v275, %v371
    %v373 = vpop.f32.mrf.mxu0
    %374 = vmatprep.mubr.f32.mxu0 0.0
    %375 = vmatmul.mubr.f32.gmra.mxu0 %v293
    %v376 = vpop.f32.mrf.mxu0
    %v377 = vadd.f32 %v280, %v376
    %v378 = vpop.f32.mrf.mxu0
    %379 = vdwg.mxu0
    %v380 = vmax.f32 %v362, 0.0
    %v381 = vmax.f32 %v367, 0.0
    %v382 = vmax.f32 %v372, 0.0
    %v383 = vmax.f32 %v377, 0.0
    %v384 = vld [vmem:[#allocation5 + $0x90] sm:$0xff]
    %v385 = vld [vmem:[#allocation5 + $0x98] sm:$0xff]
    %v386 = vld [vmem:[#allocation5 + $0xa0] sm:$0xff]
    %v387 = vld [vmem:[#allocation5 + $0xa8] sm:$0xff]
    %389 = vset.pattern.permute.xlu0 0
    %390 = vperm.xlu0 %389, %v386
    %v391 = vpop.permute.xlu0 %390
    %394 = vset.pattern.permute.xlu0 0
    %395 = vperm.xlu0 %394, %v387
    %v396 = vpop.permute.xlu0 %395
    %v399 = vsel %vm179, %v384, 0
    %v402 = vsel %vm179, %v385, 0
    %404 = vmatprep.subr.mxu0 0.0
    %405 = vmatpush1.msra.mxu0 0.0
    %406 = vmatprep.subr.mxu0 0.0
    %407 = vmatpush1.msra.mxu0 0.0
    %408 = vmatprep.subr.mxu0 0.0
    %409 = vmatpush1.msra.mxu0 0.0
    %410 = vmatprep.subr.mxu0 0.0
    %411 = vmatpush1.msra.mxu0 0.0
    %412 = vmatprep.subr.mxu0 0.0
    %413 = vmatpush1.msra.mxu0 0.0
    %414 = vmatprep.subr.mxu0 0.0
    %415 = vmatpush1.msra.mxu0 0.0
    %416 = vmatprep.subr.mxu0 0.0
    %417 = vmatpush1.msra.mxu0 0.0
    %418 = vmatprep.subr.mxu0 0.0
    %419 = vmatpush1.msra.mxu0 0.0
    %420 = vmatprep.subr.mxu0 0.0
    %421 = vmatpush1.msra.mxu0 0.0
    %422 = vmatprep.subr.mxu0 0.0
    %423 = vmatpush1.msra.mxu0 0.0
    %424 = vmatprep.subr.mxu0 0.0
    %425 = vmatpush1.msra.mxu0 0.0
    %426 = vmatprep.subr.mxu0 0.0
    %427 = vmatpush1.msra.mxu0 0.0
    %428 = vmatprep.subr.mxu0 0.0
    %429 = vmatpush1.msra.mxu0 %v383
    %430 = vmatprep.subr.mxu0 0.0
    %431 = vmatpush1.msra.mxu0 %v382
    %432 = vmatprep.subr.mxu0 0.0
    %433 = vmatpush1.msra.mxu0 %v381
    %434 = vmatprep.subr.mxu0 0.0
    %435 = vmatpush1.msra.mxu0 %v380
    %436 = vmatprep.subr.mxu0 0.0
    %437 = vmatpush2.msra.mxu0 0.0
    %438 = vmatprep.subr.mxu0 0.0
    %439 = vmatpush2.msra.mxu0 0.0
    %440 = vmatprep.subr.mxu0 0.0
    %441 = vmatpush2.msra.mxu0 0.0
    %442 = vmatprep.subr.mxu0 0.0
    %443 = vmatpush2.msra.mxu0 0.0
    %444 = vmatprep.subr.mxu0 0.0
    %445 = vmatpush2.msra.mxu0 0.0
    %446 = vmatprep.subr.mxu0 0.0
    %447 = vmatpush2.msra.mxu0 0.0
    %448 = vmatprep.subr.mxu0 0.0
    %449 = vmatpush2.msra.mxu0 0.0
    %450 = vmatprep.subr.mxu0 0.0
    %451 = vmatpush2.msra.mxu0 0.0
    %452 = vmatprep.subr.mxu0 0.0
    %453 = vmatpush2.msra.mxu0 0.0
    %454 = vmatprep.subr.mxu0 0.0
    %455 = vmatpush2.msra.mxu0 0.0
    %456 = vmatprep.subr.mxu0 0.0
    %457 = vmatpush2.msra.mxu0 0.0
    %458 = vmatprep.subr.mxu0 0.0
    %459 = vmatpush2.msra.mxu0 0.0
    %460 = vmatprep.subr.mxu0 0.0
    %461 = vmatpush2.msra.mxu0 0.0
    %462 = vmatprep.subr.mxu0 0.0
    %463 = vmatpush2.msra.mxu0 0.0
    %464 = vmatprep.subr.mxu0 0.0
    %465 = vmatpush2.msra.mxu0 0.0
    %466 = vmatprep.subr.mxu0 0.0
    %467 = vmatpush2.msra.mxu0 0.0
    %468 = vmatprep.mubr.f32.mxu0 0.0
    %469 = vmatmul.mubr.f32.gmra.mxu0 %v399
    %v470 = vpop.f32.mrf.mxu0
    %v471 = vadd.f32 %v391, %v470
    %v472 = vpop.f32.mrf.mxu0
    %473 = vmatprep.mubr.f32.mxu0 0.0
    %474 = vmatmul.mubr.f32.gmra.mxu0 %v402
    %v475 = vpop.f32.mrf.mxu0
    %v476 = vadd.f32 %v396, %v475
    %v477 = vpop.f32.mrf.mxu0
    %478 = vdwg.mxu0
    %479 = vst [vmem:[#allocation7] sm:$0xff] %v471
    %480 = vst [vmem:[#allocation7 + $0x8] sm:$0xff] %v476
    // Predicated region
    $region18: #{tpu_custom_call.1} parent=1 // pred_check
      _
    $region19: #{tpu_custom_call.1} parent=1 // pred_check_branch
      %482 = sbr.rel (0) target = $region21
    $region20: #{tpu_custom_call.1} parent=1 // pred_region
      %s484 = ssub.s32 256, 256
      %485 = vsyncadd [#allocation4], %s484
      %s486 = sshll.u32 [#allocation7], 4
      %s487 = int_to_ptr.vmem [resolvable:$true] %s486
      %492 = dma.vmem_to_hbm [thread:$0]  %s487, 256, %s2, [#allocation4], 128, 128, 8
    $region21: #{tpu_custom_call.1} parent=1 // pred_fallthru
      _
    // Predicated region
    $region22: #{tpu_custom_call.1} parent=1 // pred_check
      _
    $region23: #{tpu_custom_call.1} parent=1 // pred_check_branch
      %494 = sbr.rel (0) target = $region25
    $region24: #{tpu_custom_call.1} parent=1 // pred_region
      %495 = dma.done [#allocation4], 256
    $region25: #{tpu_custom_call.1} parent=1 // pred_fallthru
      _
    %496 = vsyncpa [#allocation3], 1
    %497 = vsyncpa [#allocation6], 1
    %498 = vsyncpa [#allocation4], 1

</llo_original>
